<compile_context>
chip_gen: v7x
topology: tpu7x:2x2x1
jax: 0.10.0
libtpu: 0.0.40
codegen_flags: <defaults>
</compile_context>

<pallas_src>
import functools

import jax
import jax.numpy as jnp
from jax.experimental import pallas as pl
from jax.experimental.pallas import tpu as pltpu

EPS = 1e-5          # args.norm_eps
TQ_DEFAULT = 256    # query-sequence tile


# --------------------------- VMEM limit helper -------------------------------

def _clamp_vmem(want_bytes):
    cap = 48 << 20                      # safe default: below v7x's 64 MiB physical
    try:
        cap = int(pltpu.get_tpu_info().vmem_capacity_bytes * 0.85)
    except Exception:
        pass
    return int(max(16 << 20, min(int(want_bytes), cap)))


# --------------------------- shared RMSNorm kernel ---------------------------

def _rmsnorm_kernel(x_ref, w_ref, o_ref):
    x = x_ref[0]                                          # (TQ, D) f32
    ms = jnp.mean(x * x, axis=-1, keepdims=True)
    o_ref[0] = (x * jax.lax.rsqrt(ms + EPS) * w_ref[...]).astype(o_ref.dtype)


def rmsnorm_bf16(x, w, *, tq=TQ_DEFAULT):
    """rmsnorm(x) * w emitted in bf16 (MXU-ready). Hoisted out of the branch
    kernels because both branches consume rmsnorm(x) AND rmsnorm(y)."""
    B, S, D = x.shape
    TQ = min(S, tq)
    want = 4 * (4 + 2) * TQ * D + 4 * D + (4 << 20)
    return pl.pallas_call(
        _rmsnorm_kernel,
        out_shape=jax.ShapeDtypeStruct((B, S, D), jnp.bfloat16),
        grid_spec=pltpu.PrefetchScalarGridSpec(
            num_scalar_prefetch=0,
            grid=(B, pl.cdiv(S, TQ)),
            in_specs=[pl.BlockSpec((1, TQ, D), lambda b, q: (b, q, 0)),
                      pl.BlockSpec((1, D), lambda b, q: (0, 0))],
            out_specs=pl.BlockSpec((1, TQ, D), lambda b, q: (b, q, 0)),
        ),
        compiler_params=pltpu.CompilerParams(
            dimension_semantics=("parallel", "parallel"),
            vmem_limit_bytes=_clamp_vmem(want)),
    )(x, w)


# ------------------------------ branch kernel --------------------------------

def _branch_kernel(h_ref, nh_ref, nc_ref,
                   wq_ref, wkv_ref, wo_ref,
                   w1_ref, w3_ref, w2_ref, ffn_norm_w_ref,
                   out_ref,
                   q_s, kv_s, attn_s,
                   *, n_heads, head_dim, dim):
    bf16 = jnp.bfloat16
    nh = nh_ref[0]                                        # (TQ, D) bf16 (pre-normalized)
    nc = nc_ref[0]                                        # (Sk, D) bf16 (pre-normalized)

    # Q projection; fold the 1/sqrt(head_dim) scale in ONCE before the head loop.
    scale = 1.0 / (head_dim ** 0.5)
    q = jnp.dot(nh, wq_ref[...], preferred_element_type=jnp.float32)
    q_s[...] = (q * scale).astype(bf16)

    # Fused K|V projection: one (Sk, D) @ (D, 2D) matmul.
    kv = jnp.dot(nc, wkv_ref[...], preferred_element_type=jnp.float32)
    kv_s[...] = kv.astype(bf16)

    # Per-head attention. Per-head outputs are staged through a VMEM scratch
    # (bounds live ranges) and wo is applied ONCE as a full-width matmul after
    # the loop instead of n_heads skinny matmuls.
    for hh in range(n_heads):
        ksl = slice(hh * head_dim, (hh + 1) * head_dim)
        vsl = slice(dim + hh * head_dim, dim + (hh + 1) * head_dim)
        qh = q_s[:, ksl]                                  # (TQ, hd) bf16
        kh = kv_s[:, ksl]                                 # (Sk, hd) bf16
        vh = kv_s[:, vsl]                                 # (Sk, hd) bf16
        # Transpose-free scores: contract last dims of q and k on the MXU.
        s = jax.lax.dot_general(qh, kh, (((1,), (1,)), ((), ())),
                                preferred_element_type=jnp.float32)   # (TQ, Sk)
        s = s - jnp.max(s, axis=-1, keepdims=True)
        p = jnp.exp(s)
        p = p * pl.reciprocal(jnp.sum(p, axis=-1, keepdims=True), approx=True)
        oh = jnp.dot(p.astype(bf16), vh, preferred_element_type=jnp.float32)
        attn_s[:, ksl] = oh                               # f32 scratch

    # Single full-width output projection.
    attn_out = jnp.dot(attn_s[...].astype(bf16), wo_ref[...],
                       preferred_element_type=jnp.float32)            # (TQ, D)

    # SwiGLU FFN: w2( silu(w1(a)) * w3(a) ); bf16 MXU inputs, f32 accumulation,
    # silu/sigmoid stays f32 on the VPU/EUP.
    ao = attn_out.astype(bf16)
    g = jnp.dot(ao, w1_ref[...], preferred_element_type=jnp.float32)  # (TQ, H)
    u = jnp.dot(ao, w3_ref[...], preferred_element_type=jnp.float32)  # (TQ, H)
    gate = g * jax.nn.sigmoid(g)
    ffn = jnp.dot((gate * u).astype(bf16), w2_ref[...],
                  preferred_element_type=jnp.float32)                 # (TQ, D)

    res = ffn + h_ref[0]                                  # residual = ORIGINAL input (f32)
    ms = jnp.mean(res * res, axis=-1, keepdims=True)
    out_ref[0] = (res * jax.lax.rsqrt(ms + EPS) * ffn_norm_w_ref[...]).astype(out_ref.dtype)


def _branch_cost(B, Sq, Sk, D, H, n_heads):
    flops = 2 * B * Sq * D * D                  # q projection
    flops += 2 * B * Sk * D * (2 * D)           # fused kv projection
    flops += 2 * 2 * B * Sq * Sk * D            # scores + p@v (all heads)
    flops += 2 * B * Sq * D * D                 # wo
    flops += 3 * 2 * B * Sq * D * H             # w1, w3, w2
    transcendentals = B * (n_heads * Sq * Sk + Sq * H + n_heads * Sq + Sq)
    bytes_accessed = 2 * (4 * D * D + 3 * D * H)            # bf16 weights
    bytes_accessed += B * Sq * D * (4 + 2 + 4) + B * Sk * D * 2
    return pl.CostEstimate(flops=int(flops),
                           transcendentals=int(transcendentals),
                           bytes_accessed=int(bytes_accessed))


def _branch_vmem_want(D, H, Sk, TQ):
    weights = 2 * (4 * D * D + 3 * D * H)                       # bf16
    io_blocks = 4 * TQ * D + 2 * TQ * D + 2 * Sk * D + 4 * TQ * D + 8 * D
    scratch = 2 * TQ * D + 2 * Sk * 2 * D + 4 * TQ * D
    temps = 4 * TQ * (3 * H + 3 * D) + 4 * TQ * Sk * 2
    return 2 * (weights + io_blocks) + scratch + temps + (8 << 20)


def cross_attn_branch(h, nh, nc, bpw, ffn_norm_w, n_heads, *, tq=TQ_DEFAULT):
    """One branch: out = ffn_norm( FFN( CrossAttn(nh, nc) ) + h ).

    h : original hidden (residual source), f32.
    nh/nc : pre-normalized hidden/context, bf16.
    bpw : dict of bf16 weights (wq, wkv (fused k|v), wo, w1, w3, w2).
    """
    B, Sq, D = h.shape
    Sk = nc.shape[1]
    head_dim = D // n_heads
    H = bpw["w1"].shape[1]
    TQ = min(Sq, tq)
    nq = pl.cdiv(Sq, TQ)

    kernel = functools.partial(_branch_kernel, n_heads=n_heads,
                               head_dim=head_dim, dim=D)

    def wspec(shape):
        return pl.BlockSpec(shape, lambda b, q: (0, 0))

    return pl.pallas_call(
        kernel,
        out_shape=jax.ShapeDtypeStruct((B, Sq, D), jnp.float32),
        grid_spec=pltpu.PrefetchScalarGridSpec(
            num_scalar_prefetch=0,
            grid=(B, nq),
            in_specs=[
                pl.BlockSpec((1, TQ, D), lambda b, q: (b, q, 0)),   # h (residual, f32)
                pl.BlockSpec((1, TQ, D), lambda b, q: (b, q, 0)),   # nh (bf16)
                pl.BlockSpec((1, Sk, D), lambda b, q: (b, 0, 0)),   # nc (bf16)
                wspec((D, D)),            # wq
                wspec((D, 2 * D)),        # wkv (fused k|v)
                wspec((D, D)),            # wo
                wspec((D, H)),            # w1
                wspec((D, H)),            # w3
                wspec((H, D)),            # w2
                wspec((1, D)),            # ffn_norm weight (f32)
            ],
            out_specs=pl.BlockSpec((1, TQ, D), lambda b, q: (b, q, 0)),
            scratch_shapes=[
                pltpu.VMEM((TQ, D), jnp.bfloat16),       # scaled Q
                pltpu.VMEM((Sk, 2 * D), jnp.bfloat16),   # fused K|V
                pltpu.VMEM((TQ, D), jnp.float32),        # per-head attention output
            ],
        ),
        compiler_params=pltpu.CompilerParams(
            dimension_semantics=("parallel", "parallel"),
            vmem_limit_bytes=_clamp_vmem(_branch_vmem_want(D, H, Sk, TQ)),
        ),
        cost_estimate=_branch_cost(B, Sq, Sk, D, H, n_heads),
    )(h, nh, nc,
      bpw["wq"], bpw["wkv"], bpw["wo"],
      bpw["w1"], bpw["w3"], bpw["w2"],
      ffn_norm_w)


# ------------------------------ block wrapper --------------------------------

def _prep_branch_weights(bp):
    """Cast weights to bf16 and fuse wk|wv into one (D, 2D) matrix."""
    bf = jnp.bfloat16
    return {
        "wq": bp["wq"].astype(bf),
        "wkv": jnp.concatenate([bp["wk"], bp["wv"]], axis=1).astype(bf),
        "wo": bp["wo"].astype(bf),
        "w1": bp["w1"].astype(bf),
        "w3": bp["w3"].astype(bf),
        "w2": bp["w2"].astype(bf),
    }


def cross_attention_block_llama(x, y, params):
    """Returns (out_x, out_y), mirroring CrossAttentionBlockLLaMA.forward
    (start_pos=0, freqs_cis=None, mask=None)."""
    n_heads = params["n_heads"]
    attn_norm_w = params["attn_norm_w"]

    # Shared attention_norm hoisted: computed once, consumed by both branches.
    nx = rmsnorm_bf16(x, attn_norm_w)
    ny = rmsnorm_bf16(y, attn_norm_w)

    bx = _prep_branch_weights(params["branch_x"])
    by = _prep_branch_weights(params["branch_y"])

    out_x = cross_attn_branch(x, nx, ny, bx, params["branch_x"]["ffn_norm_w"], n_heads)
    out_y = cross_attn_branch(y, ny, nx, by, params["branch_y"]["ffn_norm_w"], n_heads)
    return out_x, out_y


# ----------------------------- parameter setup -------------------------------

def llama_ffn_hidden(dim, multiple_of):
    hidden = 4 * dim
    hidden = int(2 * hidden / 3)
    return multiple_of * ((hidden + multiple_of - 1) // multiple_of)


def init_params(key, dim, n_heads, multiple_of):
    hidden_dim = llama_ffn_hidden(dim, multiple_of)

    def branch(k):
        ks = jax.random.split(k, 8)
        s = 0.05
        return {
            "wq": (jax.random.normal(ks[0], (dim, dim)) * s).astype(jnp.float32),
            "wk": (jax.random.normal(ks[1], (dim, dim)) * s).astype(jnp.float32),
            "wv": (jax.random.normal(ks[2], (dim, dim)) * s).astype(jnp.float32),
            "wo": (jax.random.normal(ks[3], (dim, dim)) * s).astype(jnp.float32),
            "w1": (jax.random.normal(ks[4], (dim, hidden_dim)) * s).astype(jnp.float32),
            "w2": (jax.random.normal(ks[5], (hidden_dim, dim)) * s).astype(jnp.float32),
            "w3": (jax.random.normal(ks[6], (dim, hidden_dim)) * s).astype(jnp.float32),
            "ffn_norm_w": (1.0 + 0.01 * jax.random.normal(ks[7], (1, dim))).astype(jnp.float32),
        }

    kx, ky, kn = jax.random.split(key, 3)
    return {
        "n_heads": n_heads,
        "attn_norm_w": (1.0 + 0.01 * jax.random.normal(kn, (1, dim))).astype(jnp.float32),
        "branch_x": branch(kx),
        "branch_y": branch(ky),
    }


# ------------------------------ pure-JAX reference ---------------------------

def _branch_ref(h, c, bp, attn_norm_w, n_heads):
    def rms(t, w):
        return t * jax.lax.rsqrt(jnp.mean(t * t, -1, keepdims=True) + EPS) * w

    nh = rms(h, attn_norm_w)
    nc = rms(c, attn_norm_w)
    B, Sq, D = nh.shape
    Sk = nc.shape[1]
    hd = D // n_heads
    q = (nh @ bp["wq"]).reshape(B, Sq, n_heads, hd).transpose(0, 2, 1, 3)
    k = (nc @ bp["wk"]).reshape(B, Sk, n_heads, hd).transpose(0, 2, 1, 3)
    v = (nc @ bp["wv"]).reshape(B, Sk, n_heads, hd).transpose(0, 2, 1, 3)
    s = jnp.einsum("bhqd,bhkd->bhqk", q, k) / jnp.sqrt(hd)
    s = jax.nn.softmax(s, axis=-1)
    o = jnp.einsum("bhqk,bhkd->bhqd", s, v).transpose(0, 2, 1, 3).reshape(B, Sq, D)
    attn_out = o @ bp["wo"]
    g = attn_out @ bp["w1"]
    ffn = (jax.nn.silu(g) * (attn_out @ bp["w3"])) @ bp["w2"]
    return rms(ffn + h, bp["ffn_norm_w"])


# ------------------------------------ main ------------------------------------

if __name__ == "__main__":
    B, S_X, S_Y, DIM, N_HEADS, MULT = 2, 8, 8, 32, 4, 32

    key = jax.random.PRNGKey(0)
    kx, ky, kp = jax.random.split(key, 3)
    x = jax.random.normal(kx, (B, S_X, DIM), dtype=jnp.float32)
    y = jax.random.normal(ky, (B, S_Y, DIM), dtype=jnp.float32)
    params = init_params(kp, DIM, N_HEADS, MULT)

    out_x, out_y = cross_attention_block_llama(x, y, params)
    jax.block_until_ready((out_x, out_y))

    ref_x = _branch_ref(x, y, params["branch_x"], params["attn_norm_w"], N_HEADS)
    ref_y = _branch_ref(y, x, params["branch_y"], params["attn_norm_w"], N_HEADS)
    assert out_x.shape == (B, S_X, DIM) and out_y.shape == (B, S_Y, DIM)
    # bf16 MXU inputs (f32 accumulation) vs pure-f32 reference -> looser tolerance.
    assert jnp.allclose(out_x, ref_x, atol=2e-2, rtol=2e-2), \
        float(jnp.max(jnp.abs(out_x - ref_x)))
    assert jnp.allclose(out_y, ref_y, atol=2e-2, rtol=2e-2), \
        float(jnp.max(jnp.abs(out_y - ref_y)))

    print("KERNEL_OK")
</pallas_src>

<mosaic_0001>
module attributes {stable_mosaic.version = 11 : i64} {
  func.func @_rmsnorm_kernel(%arg0: i32, %arg1: i32, %arg2: memref<1x8x32xf32, #tpu.memory_space<vmem>>, %arg3: memref<1x32xf32, #tpu.memory_space<vmem>>, %arg4: memref<1x8x32xbf16, #tpu.memory_space<vmem>>) attributes {dimension_semantics = [#tpu.dimension_semantics<parallel>, #tpu.dimension_semantics<parallel>], iteration_bounds = array<i64: 2, 1>, scalar_prefetch = 0 : i64, scratch_operands = 0 : i64, tpu.core_type = #tpu.core_type<tc>, window_params = [{transform_indices = @transform_0, window_bounds = array<i64: 1, 8, 32>}, {pipeline_mode = #tpu.pipeline_mode<synchronous>, transform_indices = @transform_1, window_bounds = array<i64: 1, 32>}, {transform_indices = @transform_2, window_bounds = array<i64: 1, 8, 32>}]} {
    %c0 = arith.constant 0 : index
    %c0_0 = arith.constant 0 : index
    %c0_1 = arith.constant 0 : index
    %0 = vector.load %arg2[%c0, %c0_0, %c0_1] : memref<1x8x32xf32, #tpu.memory_space<vmem>>, vector<1x8x32xf32>
    %1 = vector.shape_cast %0 : vector<1x8x32xf32> to vector<8x32xf32>
    %2 = arith.mulf %1, %1 : vector<8x32xf32>
    %cst = arith.constant dense<0.000000e+00> : vector<8xf32>
    %3 = vector.multi_reduction <add>, %2, %cst [1] : vector<8x32xf32> to vector<8xf32>
    %4 = vector.shape_cast %3 : vector<8xf32> to vector<8x1xf32>
    %cst_2 = arith.constant 3.200000e+01 : f32
    %5 = vector.broadcast %cst_2 : f32 to vector<8x1xf32>
    %6 = arith.divf %4, %5 : vector<8x1xf32>
    %cst_3 = arith.constant 9.99999974E-6 : f32
    %7 = vector.broadcast %cst_3 : f32 to vector<8x1xf32>
    %8 = arith.addf %6, %7 : vector<8x1xf32>
    %9 = math.rsqrt %8 : vector<8x1xf32>
    %10 = vector.broadcast %9 : vector<8x1xf32> to vector<8x32xf32>
    %11 = arith.mulf %1, %10 : vector<8x32xf32>
    %c0_4 = arith.constant 0 : index
    %c0_5 = arith.constant 0 : index
    %12 = vector.load %arg3[%c0_4, %c0_5] : memref<1x32xf32, #tpu.memory_space<vmem>>, vector<1x32xf32>
    %13 = vector.broadcast %12 : vector<1x32xf32> to vector<8x32xf32>
    %14 = arith.mulf %11, %13 : vector<8x32xf32>
    %15 = arith.truncf %14 : vector<8x32xf32> to vector<8x32xbf16>
    %c0_6 = arith.constant 0 : index
    %c0_7 = arith.constant 0 : index
    %c0_8 = arith.constant 0 : index
    %16 = vector.load %arg4[%c0_6, %c0_7, %c0_8] : memref<1x8x32xbf16, #tpu.memory_space<vmem>>, vector<1x8x32xbf16>
    %17 = vector.shape_cast %16 : vector<1x8x32xbf16> to vector<8x32xbf16>
    %18 = vector.shape_cast %15 : vector<8x32xbf16> to vector<1x8x32xbf16>
    tpu.vector_store %arg4[%c0_6, %c0_7, %c0_8], %18 {strides = array<i32>} : memref<1x8x32xbf16, #tpu.memory_space<vmem>>, vector<1x8x32xbf16>,
    return
  }
  func.func @transform_0(%arg0: i32, %arg1: i32) -> (i32, i32, i32) {
    %c0_i32 = arith.constant 0 : i32
    %c0_i32_0 = arith.constant 0 : i32
    return %arg0, %arg1, %c0_i32 : i32, i32, i32
  }
  func.func @transform_1(%arg0: i32, %arg1: i32) -> (i32, i32) {
    %c0_i32 = arith.constant 0 : i32
    %c0_i32_0 = arith.constant 0 : i32
    %c0_i32_1 = arith.constant 0 : i32
    return %c0_i32, %c0_i32_0 : i32, i32
  }
  func.func @transform_2(%arg0: i32, %arg1: i32) -> (i32, i32, i32) {
    %c0_i32 = arith.constant 0 : i32
    %c0_i32_0 = arith.constant 0 : i32
    return %arg0, %arg1, %c0_i32 : i32, i32, i32
  }
}

</mosaic_0001>

<llo_original>
// kernel: tpu_custom_call.1
$region0: #{tpu_custom_call.1}
  #allocation0 [shape = 'u32[]', space=smem, size = 0x4, offset = 0x4, fixed_abs, tag = 'smem constant byte address 0x4 - core index']
  #allocation1 [shape = 'u32[144,128]{1,0:T(1,128)}', space=vmem, size = 0x12000, scoped, tag = 'internal scratch']
  %s0 = inlined_call_operand.hbm [shape: f32[2,8,32], index: 0, kind: input, shape index: {}]
  %s1 = inlined_call_operand.vmem [shape: f32[1,32], index: 1, kind: input, shape index: {}]
  %s2 = inlined_call_operand.hbm [shape: bf16[2,8,32], index: 2, kind: output, shape index: {}]
  %s3 = sld [smem:[#allocation0]]
  $region45: #{tpu_custom_call.1} parent=0
    _
  %s5 = ssub.s32 1, %s3
  %s6 = scalar_select 0, %s5, %s3
  $region1: #{tpu_custom_call.1} parent=0
    #allocation2 [shape = 'u8[8192]{0}', space=vmem, size = 0x2000, scoped, tag = 'input window, operand 0']
    #allocation3 [shape = 's32[2]{0}', space=sflag, size = 0x8, scoped, tag = 'scoped memory for tpu_custom_call.1']
    #allocation4 [shape = 's32[2]{0}', space=sflag, size = 0x8, scoped, tag = 'scoped memory for tpu_custom_call.1']
    #allocation5 [shape = 'u8[4096]{0}', space=vmem, size = 0x1000, scoped, tag = 'output window, operand 0']
    %7 = vsyncpa [#allocation3], 0
    %s8 = scalar_lea.sflag [#allocation3], 1
    %9 = vsyncpa %s8, 0
    %10 = vsyncpa [#allocation4], 0
    %s11 = scalar_lea.sflag [#allocation4], 1
    %12 = vsyncpa %s11, 0
    loop: start=0, step=1, limit=4
    $region2: #{tpu_custom_call.1} parent=1 // loop_pre_header
      _
    $region3: #{tpu_custom_call.1} parent=1 // loop_header
      %s14 = sphi 0, %s18
      %p15 = scmp.ge.s32.totalorder %s14, 4
      %s21 = sphi 0, %s33
      %s22 = sphi 0, %s29
      %s23 = sphi 0, %s21
      %s24 = sphi 0, %s22
      %s25 = sphi 0, %s23
      %s26 = sphi 0, %s24
      %s38 = sphi 0, %s40
      %s41 = sphi 0, %s38
      %s42 = sphi 0, %s41
      %s58 = sphi 0, %s42
      %s62 = sphi 0, %s62
      %s64 = sphi 0, %s62
      %s65 = sphi 0, %s64
      %s79 = sphi 0, %s65
      %s87 = sphi 0, %s89
      %s90 = sphi 0, %s87
      %s91 = sphi 0, %s90
      %s107 = sphi 0, %s91
    $region4: #{tpu_custom_call.1} parent=1 // loop_header_branch
      %17 = sbr.rel (%p15) target = $region8
    $region5: #{tpu_custom_call.1} parent=1 // loop_body
      %s19 = ssub.s32 %s14, 1
      %s20 = ssub.s32 %s14, 2
      %s27 = sadd.s32 1, %s22
      %p28 = scmp.ge.s32.totalorder %s27, 1
      %s29 = scalar_select %p28, 0, %s27
      %s30 = sadd.s32 1, %s21
      %s31 = scalar_select %p28, %s30, %s21
      %p32 = scmp.ge.s32.totalorder %s31, 2
      %s33 = scalar_select %p32, 0, %s31
      %s34 = ssub.s32 %s21, %s33
      %s35 = ssub.s32 %s22, %s29
      %s36 = sor.u32 %s34, %s35
      %p37 = scmp.eq.s32.totalorder %s36, 0
      %s39 = sadd.s32 %s38, 1
      %s40 = scalar_select %p37, %s38, %s39
      %p43 = pneg %p37
      %p44 = scmp.eq.s32.totalorder %s14, 1
      %p45 = por %p43, %p44
      %p46 = scmp.ne.s32.totalorder %s38, %s41
      %p47 = scmp.eq.s32.totalorder %s14, 0
      %p48 = por %p46, %p47
      %p49 = scmp.ne.s32.totalorder %s38, %s41
      %p50 = scmp.eq.s32.totalorder %s19, 1
      %p51 = por %p49, %p50
      %p52 = scmp.ne.s32.totalorder %s41, %s42
      %p53 = scmp.eq.s32.totalorder %s19, 0
      %p54 = por %p52, %p53
      %p55 = scmp.ne.s32.totalorder %s41, %s42
      %p56 = scmp.eq.s32.totalorder %s20, 1
      %p57 = por %p55, %p56
      %p59 = scmp.ne.s32.totalorder %s42, %s58
      %p60 = scmp.eq.s32.totalorder %s20, 0
      %p61 = por %p59, %p60
      %s63 = sadd.s32 %s62, 1
      %p66 = scmp.eq.s32.totalorder %s14, 1
      %p67 = scmp.ne.s32.totalorder %s62, %s64
      %p68 = scmp.eq.s32.totalorder %s14, 0
      %p69 = por %p67, %p68
      %p70 = scmp.ne.s32.totalorder %s62, %s64
      %p71 = scmp.eq.s32.totalorder %s19, 1
      %p72 = por %p70, %p71
      %p73 = scmp.ne.s32.totalorder %s64, %s65
      %p74 = scmp.eq.s32.totalorder %s19, 0
      %p75 = por %p73, %p74
      %p76 = scmp.ne.s32.totalorder %s64, %s65
      %p77 = scmp.eq.s32.totalorder %s20, 1
      %p78 = por %p76, %p77
      %p80 = scmp.ne.s32.totalorder %s65, %s79
      %p81 = scmp.eq.s32.totalorder %s20, 0
      %p82 = por %p80, %p81
      %s83 = ssub.s32 %s21, %s33
      %s84 = ssub.s32 %s22, %s29
      %s85 = sor.u32 %s83, %s84
      %p86 = scmp.eq.s32.totalorder %s85, 0
      %s88 = sadd.s32 %s87, 1
      %s89 = scalar_select %p86, %s87, %s88
      %p92 = pneg %p86
      %p93 = scmp.eq.s32.totalorder %s14, 1
      %p94 = por %p92, %p93
      %p95 = scmp.ne.s32.totalorder %s87, %s90
      %p96 = scmp.eq.s32.totalorder %s14, 0
      %p97 = por %p95, %p96
      %p98 = scmp.ne.s32.totalorder %s87, %s90
      %p99 = scmp.eq.s32.totalorder %s19, 1
      %p100 = por %p98, %p99
      %p101 = scmp.ne.s32.totalorder %s90, %s91
      %p102 = scmp.eq.s32.totalorder %s19, 0
      %p103 = por %p101, %p102
      %p104 = scmp.ne.s32.totalorder %s90, %s91
      %p105 = scmp.eq.s32.totalorder %s20, 1
      %p106 = por %p104, %p105
      %p108 = scmp.ne.s32.totalorder %s91, %s107
      %p109 = scmp.eq.s32.totalorder %s20, 0
      %p110 = por %p108, %p109
      %p111 = scmp.le.s32.totalorder 1, %s14
      %p112 = scmp.lt.s32.totalorder %s14, 3
      %p113 = pnand %p111, %p112
      %p114 = pneg %p113
      // Predicated region
      $region9: #{tpu_custom_call.1} parent=5 // pred_check
        _
      $region10: #{tpu_custom_call.1} parent=5 // pred_check_branch
        %116 = sbr.rel (%p113) target = $region12
      $region11: #{tpu_custom_call.1} parent=5 // pred_region
        %s117 = ssub.s32 %s14, 1
        // Predicated region
        $region13: #{tpu_custom_call.1} parent=11 // pred_check
          %p118 = pneg %p75
        $region14: #{tpu_custom_call.1} parent=11 // pred_check_branch
          %120 = sbr.rel (%p118) target = $region16
        $region15: #{tpu_custom_call.1} parent=11 // pred_region
          _
        $region16: #{tpu_custom_call.1} parent=11 // pred_fallthru
          _
      $region12: #{tpu_custom_call.1} parent=5 // pred_fallthru
        _
      %p121 = scmp.lt.s32.totalorder %s14, 2
      // Predicated region
      $region17: #{tpu_custom_call.1} parent=5 // pred_check
        %p122 = pneg %p121
      $region18: #{tpu_custom_call.1} parent=5 // pred_check_branch
        %124 = sbr.rel (%p122) target = $region20
      $region19: #{tpu_custom_call.1} parent=5 // pred_region
        // Predicated region
        $region21: #{tpu_custom_call.1} parent=19 // pred_check
          %p125 = pneg %p48
        $region22: #{tpu_custom_call.1} parent=19 // pred_check_branch
          %127 = sbr.rel (%p125) target = $region24
        $region23: #{tpu_custom_call.1} parent=19 // pred_region
          %s128 = sand.u32 %s38, 1
          %s129 = scalar_lea.sflag [#allocation3], %s128
          %s130 = sand.u32 %s38, 1
          %s131 = smul.addr %s130, 8
          %s132 = scalar_lea.vmem [#allocation2], %s131
          %s134 = ssub.s32 128, 128
          %135 = vsyncadd %s129, %s134
          %s136 = sadd.s32 %s22, %s21
          %s137 = smul.addr %s136, 128
          %s138 = scalar_lea.hbm %s0, %s137
          %s140 = sshll.u32 %s132, 4
          %s141 = int_to_ptr.vmem [resolvable:$true] %s140
          %143 = dma.hbm_to_vmem [thread:$0]  %s138, 128, %s141, %s129
        $region24: #{tpu_custom_call.1} parent=19 // pred_fallthru
          _
      $region20: #{tpu_custom_call.1} parent=5 // pred_fallthru
        _
      %p144 = scmp.le.s32.totalorder 1, %s14
      %p145 = scmp.lt.s32.totalorder %s14, 3
      %p146 = pnand %p144, %p145
      %p147 = pneg %p146
      // Predicated region
      $region25: #{tpu_custom_call.1} parent=5 // pred_check
        _
      $region26: #{tpu_custom_call.1} parent=5 // pred_check_branch
        %149 = sbr.rel (%p146) target = $region28
      $region27: #{tpu_custom_call.1} parent=5 // pred_region
        %s150 = ssub.s32 %s14, 1
        %s151 = sand.u32 %s41, 1
        %s152 = scalar_lea.sflag [#allocation3], %s151
        %s153 = sand.u32 %s41, 1
        %s154 = smul.addr %s153, 8
        %s155 = scalar_lea.vmem [#allocation2], %s154
        // Predicated region
        $region29: #{tpu_custom_call.1} parent=27 // pred_check
          %p156 = pneg %p54
        $region30: #{tpu_custom_call.1} parent=27 // pred_check_branch
          %158 = sbr.rel (%p156) target = $region32
        $region31: #{tpu_custom_call.1} parent=27 // pred_region
          %159 = dma.done %s152, 128
        $region32: #{tpu_custom_call.1} parent=27 // pred_fallthru
          _
        %s160 = sand.u32 %s41, 1
        %s161 = scalar_lea.sflag [#allocation3], %s160
        %s162 = sand.u32 %s41, 1
        %s163 = smul.addr %s162, 8
        %s164 = scalar_lea.vmem [#allocation2], %s163
        %p165 = pneg %p54
        %p166 = pneg %p51
        %p167 = pneg %p75
        %p168 = pneg %p72
        %p169 = pneg %p103
        %p170 = pneg %p100
        %s171 = sand.u32 %s90, 1
        %s172 = scalar_lea.sflag [#allocation4], %s171
        %s173 = sand.u32 %s90, 1
        %s174 = smul.addr %s173, 4
        %s175 = scalar_lea.vmem [#allocation5], %s174
        %v176 = vld [vmem:[%s155] sm:$0xff]
        %v177 = vmul.f32 %v176, %v176
        %vm178 = vcmask 261120
        %v179 = vsel %vm178, %v177, 0.0
        %180 = vadd.xlane.f32.xlu0 %v179
        %v181 = vpop.xlane.xlu0 %180
        %v182 = vrcp.pop 32.0
        %v183 = vmul.f32 %v181, %v182
        %v184 = vadd.f32 %v183, 1e-05
        %v185 = vrsqrt.pop %v184
        %v186 = vmul.f32 %v176, %v185
        %v187 = vld [vmem:[%s1] sm:$0x1]
        %v189 = vlaneseq
        %v190 = vshrl.u32 %v189, 7
        %v191 = vsub.s32 0, %v190
        %v192 = vrot.slane %v187, %v191
        %v194 = vmul.f32 %v186, %v192
        %v195 = vpack.c.bf16 %v194, %v194
        %vm196 = vcmask 257024
        %197 = vst.msk [vmem:[%s175] sm:$0xf] %vm196, %v195
        %s198 = sand.u32 %s90, 1
        %s199 = scalar_lea.sflag [#allocation4], %s198
        %s200 = sand.u32 %s90, 1
        %s201 = smul.addr %s200, 4
        %s202 = scalar_lea.vmem [#allocation5], %s201
        // Predicated region
        $region33: #{tpu_custom_call.1} parent=27 // pred_check
          %p203 = pneg %p100
        $region34: #{tpu_custom_call.1} parent=27 // pred_check_branch
          %205 = sbr.rel (%p203) target = $region36
        $region35: #{tpu_custom_call.1} parent=27 // pred_region
          %s207 = ssub.s32 64, 64
          %208 = vsyncadd %s199, %s207
          %s209 = sadd.s32 %s24, %s23
          %s210 = smul.addr %s209, 64
          %s211 = scalar_lea.hbm %s2, %s210
          %s213 = sshll.u32 %s202, 4
          %s214 = int_to_ptr.vmem [resolvable:$true] %s213
          %216 = dma.vmem_to_hbm [thread:$0]  %s214, 64, %s211, %s199
        $region36: #{tpu_custom_call.1} parent=27 // pred_fallthru
          _
      $region28: #{tpu_custom_call.1} parent=5 // pred_fallthru
        _
      %p217 = scmp.le.s32.totalorder 2, %s14
      // Predicated region
      $region37: #{tpu_custom_call.1} parent=5 // pred_check
        %p218 = pneg %p217
      $region38: #{tpu_custom_call.1} parent=5 // pred_check_branch
        %220 = sbr.rel (%p218) target = $region40
      $region39: #{tpu_custom_call.1} parent=5 // pred_region
        %s221 = ssub.s32 %s14, 2
        // Predicated region
        $region41: #{tpu_custom_call.1} parent=39 // pred_check
          %p222 = pneg %p106
        $region42: #{tpu_custom_call.1} parent=39 // pred_check_branch
          %224 = sbr.rel (%p222) target = $region44
        $region43: #{tpu_custom_call.1} parent=39 // pred_region
          %s225 = sand.u32 %s91, 1
          %s226 = scalar_lea.sflag [#allocation4], %s225
          %s227 = sand.u32 %s91, 1
          %s228 = smul.addr %s227, 4
          %s229 = scalar_lea.vmem [#allocation5], %s228
          %230 = dma.done %s226, 64
        $region44: #{tpu_custom_call.1} parent=39 // pred_fallthru
          _
      $region40: #{tpu_custom_call.1} parent=5 // pred_fallthru
        _
    $region6: #{tpu_custom_call.1} parent=1 // loop_footer
      %s18 = sadd.s32 1, %s14
    $region7: #{tpu_custom_call.1} parent=1 // loop_footer_branch
      %13 = sbr.rel target = $region3
    $region8: #{tpu_custom_call.1} parent=1 // loop_exit
      _
    %231 = vsyncpa [#allocation3], 1
    %s232 = scalar_lea.sflag [#allocation3], 1
    %233 = vsyncpa %s232, 1
    %234 = vsyncpa [#allocation4], 1
    %s235 = scalar_lea.sflag [#allocation4], 1
    %236 = vsyncpa %s235, 1

</llo_original>
